<compile_context>
chip_gen: v7x
topology: tpu7x:2x2x1
jax: 0.10.0
libtpu: 0.0.40
codegen_flags: <defaults>
</compile_context>

<pallas_src>
import math

import jax
import jax.numpy as jnp
from jax.experimental import pallas as pl
from jax.experimental.pallas import tpu as pltpu

_LANE_CANDIDATES = (2048, 1024, 512, 256, 128)
_MIN_PALLAS_ELEMS = 64 * 1024  # below this, a fused XLA multiply beats a kernel launch


def _cdiv(a, b):
    return -(-a // b)


def _round_up(a, m):
    return _cdiv(a, m) * m


def _scale_kernel(scale_ref, x_ref, o_ref):
    # scale_ref: SMEM (1,) float32 scalar; x_ref / o_ref: VMEM (row_tile, lane).
    o_ref[...] = (x_ref[...] * scale_ref[0]).astype(o_ref.dtype)


def _default_block_bytes():
    # v5e's ~0.8 TB/s HBM already amortizes the per-step overhead at ~4 MiB;
    # v6e / v7x benefit from ~8 MiB blocks.
    try:
        kind = jax.devices()[0].device_kind.lower()
    except Exception:
        kind = ""
    if "v5e" in kind or "v5 lite" in kind or "v5lite" in kind:
        return 4 << 20
    return 8 << 20


def _vmem_limit_cap():
    # v7x has only 64 MiB VMEM per TensorCore; leave ~25% headroom for compiler scratch.
    try:
        return int(pltpu.get_tpu_info().vmem_capacity_bytes) * 3 // 4
    except Exception:
        return 48 << 20


def _choose_row_tile(rows, lane, dsize, sublane, target_block_bytes):
    row_tile = max(sublane, (target_block_bytes // (lane * dsize)) // sublane * sublane)
    if row_tile >= rows:
        # Whole array fits in one block.  Split into 2 blocks when possible so
        # v7x's 2 TensorCores both get work on the "parallel" grid axis
        # (no-op cost on single-TC v5e/v6e).
        if rows >= 2 * sublane:
            row_tile = _round_up(_cdiv(rows, 2), sublane)
        else:
            row_tile = rows  # full-dim block: exempt from the (8,128) rule
    else:
        nblk = _cdiv(rows, row_tile)
        # Prefer an even number of blocks for 2-TC sharding.
        if nblk > 1 and nblk % 2 == 1:
            cand = _round_up(_cdiv(rows, nblk + 1), sublane)
            if cand >= sublane:
                row_tile = cand
    return row_tile


def scale_layer(x, scale, *, target_block_bytes=None, force_pallas=False, donate_x=False):
    """Elementwise x * scale (scalar), matching torch ScaleLayer.forward."""
    scale_arr = jnp.asarray(scale)
    out_dtype = jnp.result_type(x, scale_arr)
    n = x.size

    def _xla_fallback():
        # Let XLA fuse the multiply into neighboring ops (cheapest option for
        # tiny tensors / shapes the lane-dense retiling can't cover pad-free).
        return (x * scale_arr).astype(out_dtype)

    if n == 0 or (n < _MIN_PALLAS_ELEMS and not force_pallas):
        return _xla_fallback()

    lane = next((l for l in _LANE_CANDIDATES if n % l == 0), None)
    if lane is None:
        # TODO(synk): handle sizes not divisible by 128 with a ragged tail
        # block instead of falling back to XLA.
        return _xla_fallback()

    dtype = x.dtype
    dsize = jnp.dtype(dtype).itemsize
    out_dsize = jnp.dtype(out_dtype).itemsize
    # Sublane packing multiple: 8 for 32-bit, 16 for 16-bit, 32 for 8-bit.
    sublane = {4: 8, 2: 16, 1: 32}.get(dsize, 8)

    rows = n // lane
    x2d = x.reshape(rows, lane)  # free: exact reshape, no padding, no HBM pass

    if target_block_bytes is None:
        target_block_bytes = _default_block_bytes()
    row_tile = _choose_row_tile(rows, lane, dsize, sublane, target_block_bytes)
    grid = (_cdiv(rows, row_tile),)  # ragged last block is fine: purely elementwise

    # Keep the scalar in SMEM as float32 so the product follows torch promotion
    # semantics; the result is cast to the promoted dtype on store.
    scale_smem = scale_arr.astype(jnp.float32).reshape((1,))

    in_tile_bytes = row_tile * lane * dsize
    out_tile_bytes = row_tile * lane * out_dsize
    # in + out, double-buffered, plus slack; generation-aware cap.
    vmem_limit = min(
        max(2 * (in_tile_bytes + out_tile_bytes) + (4 << 20), 8 << 20),
        _vmem_limit_cap(),
    )

    cost = pl.CostEstimate(
        flops=n,
        transcendentals=0,
        bytes_accessed=n * (dsize + out_dsize),
    )

    io_aliases = {}
    if donate_x and out_dtype == dtype:
        io_aliases = {1: 0}  # alias x2d (operand index 1) to the output buffer

    out2d = pl.pallas_call(
        _scale_kernel,
        out_shape=jax.ShapeDtypeStruct((rows, lane), out_dtype),
        grid_spec=pl.GridSpec(
            grid=grid,
            in_specs=[
                pl.BlockSpec(memory_space=pltpu.MemorySpace.SMEM),  # scalar scale
                pl.BlockSpec((row_tile, lane), lambda i: (i, 0)),
            ],
            out_specs=pl.BlockSpec((row_tile, lane), lambda i: (i, 0)),
        ),
        compiler_params=pltpu.CompilerParams(
            dimension_semantics=("parallel",),
            vmem_limit_bytes=int(vmem_limit),
        ),
        cost_estimate=cost,
        input_output_aliases=io_aliases,
    )(scale_smem, x2d)

    return out2d.reshape(x.shape)


if __name__ == "__main__":
    key = jax.random.PRNGKey(0)

    # Small GPT-2-style activation: (batch, seq, hidden).  Force the Pallas
    # path so the kernel itself is exercised (normally this size would take the
    # fused-XLA bypass).
    batch, seq, hidden = 2, 8, 32
    x = jax.random.normal(key, (batch, seq, hidden), dtype=jnp.float32)
    scale = jnp.float32(1.0 / math.sqrt(hidden))

    out = scale_layer(x, scale, force_pallas=True)
    jax.block_until_ready(out)
    ref = x * scale
    assert out.shape == ref.shape and out.dtype == ref.dtype, "shape/dtype mismatch"
    assert jnp.allclose(out, ref, atol=1e-6), "mismatch vs reference (small)"

    # Larger activation exercising the multi-block, double-buffered path
    # (rows=128, lane=2048 -> 2 blocks of (64, 2048)).
    x2 = jax.random.normal(jax.random.PRNGKey(1), (8, 256, 128), dtype=jnp.float32)
    out2 = scale_layer(x2, scale)
    jax.block_until_ready(out2)
    assert jnp.allclose(out2, x2 * scale, atol=1e-6), "mismatch vs reference (large)"

    print("KERNEL_OK")
</pallas_src>

<mosaic_0001>
module attributes {stable_mosaic.version = 11 : i64} {
  func.func @_scale_kernel(%arg0: i32, %arg1: memref<1xf32, #tpu.memory_space<smem>>, %arg2: memref<1x512xf32, #tpu.memory_space<vmem>>, %arg3: memref<1x512xf32, #tpu.memory_space<vmem>>) attributes {dimension_semantics = [#tpu.dimension_semantics<parallel>], iteration_bounds = array<i64: 1>, scalar_prefetch = 0 : i64, scratch_operands = 0 : i64, tpu.core_type = #tpu.core_type<tc>, window_params = [{transform_indices = @transform_0, window_bounds = array<i64: 1>}, {transform_indices = @transform_1, window_bounds = array<i64: 1, 512>}, {transform_indices = @transform_2, window_bounds = array<i64: 1, 512>}]} {
    %c0 = arith.constant 0 : index
    %c0_0 = arith.constant 0 : index
    %0 = vector.load %arg2[%c0, %c0_0] : memref<1x512xf32, #tpu.memory_space<vmem>>, vector<1x512xf32>
    %c0_1 = arith.constant 0 : index
    %1 = memref.load %arg1[%c0_1] : memref<1xf32, #tpu.memory_space<smem>>
    %2 = vector.broadcast %1 : f32 to vector<1x512xf32>
    %3 = arith.mulf %0, %2 : vector<1x512xf32>
    %c0_2 = arith.constant 0 : index
    %c0_3 = arith.constant 0 : index
    %4 = vector.load %arg3[%c0_2, %c0_3] : memref<1x512xf32, #tpu.memory_space<vmem>>, vector<1x512xf32>
    tpu.vector_store %arg3[%c0_2, %c0_3], %3 {strides = array<i32>} : memref<1x512xf32, #tpu.memory_space<vmem>>, vector<1x512xf32>,
    return
  }
  func.func @transform_0(%arg0: i32) -> i32 {
    %c0_i32 = arith.constant 0 : i32
    %c0_i32_0 = arith.constant 0 : i32
    return %c0_i32 : i32
  }
  func.func @transform_1(%arg0: i32) -> (i32, i32) {
    %c0_i32 = arith.constant 0 : i32
    %c0_i32_0 = arith.constant 0 : i32
    return %arg0, %c0_i32 : i32, i32
  }
  func.func @transform_2(%arg0: i32) -> (i32, i32) {
    %c0_i32 = arith.constant 0 : i32
    %c0_i32_0 = arith.constant 0 : i32
    return %arg0, %c0_i32 : i32, i32
  }
}

</mosaic_0001>

<llo_original>
// kernel: tpu_custom_call.1
$region0: #{tpu_custom_call.1}
  #allocation0 [shape = 'u32[]', space=smem, size = 0x4, offset = 0x4, fixed_abs, tag = 'smem constant byte address 0x4 - core index']
  #allocation1 [shape = 'u32[144,128]{1,0:T(1,128)}', space=vmem, size = 0x12000, scoped, tag = 'internal scratch']
  #allocation2 [shape = 'f32[1]{0:T(128)S(6)}', space=smem, size = 0x200, scoped, tag = 'scoped memory for tpu_custom_call.1']
  %s0 = inlined_call_operand.<no memory space> [shape: f32[1], index: 0, kind: input, shape index: {}]
  %s1 = inlined_call_operand.hbm [shape: f32[1,512], index: 1, kind: input, shape index: {}]
  %s2 = inlined_call_operand.hbm [shape: f32[1,512], index: 2, kind: output, shape index: {}]
  %s3 = sld [smem:[#allocation0]]
  $region22: #{tpu_custom_call.1} parent=0
    _
  %s5 = ssub.s32 1, %s3
  %s6 = scalar_select 0, %s5, %s3
  %7 = sst [smem:[#allocation2]] %s0
  $region1: #{tpu_custom_call.1} parent=0
    #allocation3 [shape = 'u8[2048]{0}', space=vmem, size = 0x800, scoped, tag = 'input window, operand 1, single buffered']
    #allocation4 [shape = 's32[1]{0}', space=sflag, size = 0x4, scoped, tag = 'scoped memory for tpu_custom_call.1']
    #allocation5 [shape = 's32[1]{0}', space=sflag, size = 0x4, scoped, tag = 'scoped memory for tpu_custom_call.1']
    #allocation6 [shape = 'u8[2048]{0}', space=vmem, size = 0x800, scoped, tag = 'output window, operand 0, single buffered']
    %8 = vsyncpa [#allocation4], 0
    %9 = vsyncpa [#allocation5], 0
    // Predicated region
    $region2: #{tpu_custom_call.1} parent=1 // pred_check
      _
    $region3: #{tpu_custom_call.1} parent=1 // pred_check_branch
      %11 = sbr.rel (0) target = $region5
    $region4: #{tpu_custom_call.1} parent=1 // pred_region
      _
    $region5: #{tpu_custom_call.1} parent=1 // pred_fallthru
      _
    // Predicated region
    $region6: #{tpu_custom_call.1} parent=1 // pred_check
      _
    $region7: #{tpu_custom_call.1} parent=1 // pred_check_branch
      %13 = sbr.rel (0) target = $region9
    $region8: #{tpu_custom_call.1} parent=1 // pred_region
      %s15 = ssub.s32 64, 64
      %16 = vsyncadd [#allocation4], %s15
      %s18 = sshll.u32 [#allocation3], 4
      %s19 = int_to_ptr.vmem [resolvable:$true] %s18
      %21 = dma.hbm_to_vmem [thread:$0]  %s1, 64, %s19, [#allocation4]
    $region9: #{tpu_custom_call.1} parent=1 // pred_fallthru
      _
    // Predicated region
    $region10: #{tpu_custom_call.1} parent=1 // pred_check
      _
    $region11: #{tpu_custom_call.1} parent=1 // pred_check_branch
      %23 = sbr.rel (0) target = $region13
    $region12: #{tpu_custom_call.1} parent=1 // pred_region
      %24 = dma.done [#allocation4], 64
    $region13: #{tpu_custom_call.1} parent=1 // pred_fallthru
      _
    %v25 = vld [vmem:[#allocation3] sm:$0xf]
    %s26 = sld [smem:[#allocation2]]
    %v27 = vstv %s26
    %v28 = vmul.f32 %v25, %v27
    %v29 = vlaneseq
    %vm30 = vcmp.ge.s32.totalorder %v29, 0
    %vm31 = vcmp.lt.s32.totalorder %v29, 512
    %vm32 = vmand %vm30, %vm31
    %33 = vst.msk [vmem:[#allocation6] sm:$0xf] %vm32, %v28
    // Predicated region
    $region14: #{tpu_custom_call.1} parent=1 // pred_check
      _
    $region15: #{tpu_custom_call.1} parent=1 // pred_check_branch
      %35 = sbr.rel (0) target = $region17
    $region16: #{tpu_custom_call.1} parent=1 // pred_region
      %s37 = ssub.s32 64, 64
      %38 = vsyncadd [#allocation5], %s37
      %s40 = sshll.u32 [#allocation6], 4
      %s41 = int_to_ptr.vmem [resolvable:$true] %s40
      %43 = dma.vmem_to_hbm [thread:$0]  %s41, 64, %s2, [#allocation5]
    $region17: #{tpu_custom_call.1} parent=1 // pred_fallthru
      _
    // Predicated region
    $region18: #{tpu_custom_call.1} parent=1 // pred_check
      _
    $region19: #{tpu_custom_call.1} parent=1 // pred_check_branch
      %45 = sbr.rel (0) target = $region21
    $region20: #{tpu_custom_call.1} parent=1 // pred_region
      %46 = dma.done [#allocation5], 64
    $region21: #{tpu_custom_call.1} parent=1 // pred_fallthru
      _
    %47 = vsyncpa [#allocation4], 1
    %48 = vsyncpa [#allocation5], 1

</llo_original>
